<compile_context>
chip_gen: v7x
topology: tpu7x:2x2x1
jax: 0.10.0
libtpu: 0.0.40
codegen_flags: <defaults>
</compile_context>

<pallas_src>
import jax
import jax.numpy as jnp
from jax.experimental import pallas as pl
from jax.experimental.pallas import tpu as pltpu


def _qnet_fused_kernel(xT_ref, w1T_ref, w2T_ref, w3T_ref, bias_ref, qT_ref):
    """One batch tile of the fused dual-head Q MLP (feature-major layout).

    Shapes seen by the kernel:
      xT_ref  : (D, TB)     D = obs_dim + act_dim, TB on the lane axis
      w1T_ref : (2H, D)     bf16, both heads column-stacked then transposed
      w2T_ref : (2H, 2H)    bf16, block-diagonal (heads stay independent)
      w3T_ref : (2, 2H)     bf16, block-diagonal
      bias_ref: (2H, 3)     f32 columns = [b1 | b2 | b3 zero-padded]
      qT_ref  : (2, TB)     rows = [q1, q2] -> lane-dense store
    """
    # Layer 1: (2H, D) @ (D, TB) -> (2H, TB); bf16 MXU operands, f32 acc.
    h = jnp.dot(w1T_ref[...], xT_ref[...], preferred_element_type=jnp.float32)
    h = jnp.maximum(h + bias_ref[:, 0:1], 0.0)

    # Layer 2: block-diagonal (2H, 2H) -- both heads in one MXU pass.
    h = jnp.dot(w2T_ref[...], h.astype(jnp.bfloat16),
                preferred_element_type=jnp.float32)
    h = jnp.maximum(h + bias_ref[:, 1:2], 0.0)

    # Layer 3: (2, 2H) @ (2H, TB) -> (2, TB); one lane-dense store.
    q = jnp.dot(w3T_ref[...], h.astype(jnp.bfloat16),
                preferred_element_type=jnp.float32)
    qT_ref[...] = q + bias_ref[0:2, 2:3]


def pack_qnetwork_params(params_q1, params_q2):
    """Fuse the two per-head MLPs into one transposed / block-diagonal set.

    Call ONCE when parameters change (not per forward).  params_q* =
    (W1, b1, W2, b2, W3, b3) with shapes (D,H), (1,H), (H,H), (1,H), (H,1),
    (1,1) where D = obs_dim + act_dim.
    """
    W1a, b1a, W2a, b2a, W3a, b3a = [jnp.asarray(p, jnp.float32) for p in params_q1]
    W1b, b1b, W2b, b2b, W3b, b3b = [jnp.asarray(p, jnp.float32) for p in params_q2]
    H = W1a.shape[1]

    # Layer 1: column-stack both heads, transpose -> (2H, D).
    w1T = jnp.concatenate([W1a, W1b], axis=1).T

    # Layers 2/3: block-diagonal so both heads ride one MXU tile.
    # NOTE: only free while 2H <= 128; for larger H use two per-head matmuls.
    zH = jnp.zeros((H, H), jnp.float32)
    w2T = jnp.concatenate(
        [jnp.concatenate([W2a, zH], axis=1),
         jnp.concatenate([zH, W2b], axis=1)], axis=0).T        # (2H, 2H)
    z1 = jnp.zeros((H, 1), jnp.float32)
    w3T = jnp.concatenate(
        [jnp.concatenate([W3a, z1], axis=1),
         jnp.concatenate([z1, W3b], axis=1)], axis=0).T        # (2, 2H)

    # Bias slab, f32 (bias add + ReLU stay on the f32 VPU path).
    b1 = jnp.concatenate([b1a, b1b], axis=1).T                 # (2H, 1)
    b2 = jnp.concatenate([b2a, b2b], axis=1).T                 # (2H, 1)
    b3 = jnp.concatenate(
        [b3a, b3b, jnp.zeros((1, 2 * H - 2), jnp.float32)], axis=1).T
    bias = jnp.concatenate([b1, b2, b3], axis=1)               # (2H, 3)

    return (w1T.astype(jnp.bfloat16), w2T.astype(jnp.bfloat16),
            w3T.astype(jnp.bfloat16), bias)


def _choose_tile(batch, block_b):
    """Batch tile: full batch if small; else a lane-dense multiple of 128,
    with an even number of grid steps so 'parallel' balances on v7x's 2 TCs."""
    if batch <= block_b:
        return batch                      # single tile == full array dim (legal)
    steps = -(-batch // block_b)
    if steps % 2:
        steps += 1
    tile = -(-batch // steps)
    return -(-tile // 128) * 128


def qnetwork_forward(obs, act, packed, *, block_b=4096):
    """Forward pass.  `packed` = pack_qnetwork_params(params_q1, params_q2)."""
    assert block_b % 128 == 0
    w1T, w2T, w3T, bias = packed
    B = obs.shape[0]
    H2, D = w1T.shape                                  # 2*hidden, obs+act dim

    # Single fused HBM pass over the batch: transpose + concat + bf16 cast
    # (halves the batch bytes the kernel has to stream).
    xT = jnp.concatenate([obs.T, act.T], axis=0).astype(jnp.bfloat16)  # (D, B)

    tb = _choose_tile(B, block_b)
    grid = (pl.cdiv(B, tb),)

    def resident(shape):
        # Weights/biases: same block every grid step -> stay VMEM-resident.
        return pl.BlockSpec(shape, lambda i: (0, 0))

    qT = pl.pallas_call(
        _qnet_fused_kernel,
        out_shape=jax.ShapeDtypeStruct((2, B), jnp.float32),
        grid_spec=pltpu.PrefetchScalarGridSpec(
            num_scalar_prefetch=0,
            grid=grid,
            in_specs=[
                pl.BlockSpec((D, tb), lambda i: (0, i)),   # x^T batch tile
                resident((H2, D)),                         # W1^T
                resident((H2, H2)),                        # W2^T block-diag
                resident((2, H2)),                         # W3^T block-diag
                resident((H2, 3)),                         # bias slab
            ],
            out_specs=pl.BlockSpec((2, tb), lambda i: (0, i)),
        ),
        compiler_params=pltpu.CompilerParams(
            dimension_semantics=("parallel",)),
    )(xT, w1T, w2T, w3T, bias)

    return qT[0:1, :].T, qT[1:2, :].T                  # (B,1), (B,1)


def _init_mlp_params(key, input_dim, hidden_dim):
    """Deterministic synthetic init for MLP(input_dim, [H, H], 1)."""
    k1, k2, k3 = jax.random.split(key, 3)
    s1 = 1.0 / jnp.sqrt(jnp.float32(input_dim))
    s2 = 1.0 / jnp.sqrt(jnp.float32(hidden_dim))
    W1 = jax.random.uniform(k1, (input_dim, hidden_dim), jnp.float32, -s1, s1)
    b1 = jnp.zeros((1, hidden_dim), jnp.float32)
    W2 = jax.random.uniform(k2, (hidden_dim, hidden_dim), jnp.float32, -s2, s2)
    b2 = jnp.zeros((1, hidden_dim), jnp.float32)
    W3 = jax.random.uniform(k3, (hidden_dim, 1), jnp.float32, -s2, s2)
    b3 = jnp.zeros((1, 1), jnp.float32)
    return (W1, b1, W2, b2, W3, b3)


def _reference_forward(obs, act, params_q1, params_q2):
    """Plain-JAX f32 reference mirroring the PyTorch forward (vector obs)."""
    x = jnp.concatenate([obs, act], axis=-1).astype(jnp.float32)

    def mlp(p):
        W1, b1, W2, b2, W3, b3 = p
        h = jnp.maximum(x @ W1 + b1, 0.0)
        h = jnp.maximum(h @ W2 + b2, 0.0)
        return h @ W3 + b3

    return mlp(params_q1), mlp(params_q2)


if __name__ == "__main__":
    # Small shapes consistent with the vector-obs branch of QNetwork.
    B, OBS_DIM, ACT_DIM, HIDDEN = 8, 16, 4, 32
    INPUT_DIM = OBS_DIM + ACT_DIM   # np.prod(obs_shape) + np.prod(act_shape)

    key = jax.random.PRNGKey(0)
    k_obs, k_act, k_q1, k_q2 = jax.random.split(key, 4)

    obs = jax.random.normal(k_obs, (B, OBS_DIM), jnp.float32)
    act = jax.random.normal(k_act, (B, ACT_DIM), jnp.float32)

    params_q1 = _init_mlp_params(k_q1, INPUT_DIM, HIDDEN)
    params_q2 = _init_mlp_params(k_q2, INPUT_DIM, HIDDEN)

    # Pack once (done again only when parameters change).
    packed = pack_qnetwork_params(params_q1, params_q2)

    forward = jax.jit(qnetwork_forward)
    q1, q2 = forward(obs, act, packed)
    jax.block_until_ready((q1, q2))

    # Sanity check against plain-JAX f32 reference (bf16 MXU -> relaxed tol).
    r1, r2 = _reference_forward(obs, act, params_q1, params_q2)
    assert q1.shape == (B, 1) and q2.shape == (B, 1)
    assert jnp.allclose(q1, r1, atol=3e-2, rtol=3e-2)
    assert jnp.allclose(q2, r2, atol=3e-2, rtol=3e-2)

    print("KERNEL_OK")
</pallas_src>

<mosaic_0001>
module attributes {stable_mosaic.version = 11 : i64} {
  func.func @_qnet_fused_kernel(%arg0: i32, %arg1: memref<20x8xbf16, #tpu.memory_space<vmem>>, %arg2: memref<64x20xbf16, #tpu.memory_space<vmem>>, %arg3: memref<64x64xbf16, #tpu.memory_space<vmem>>, %arg4: memref<2x64xbf16, #tpu.memory_space<vmem>>, %arg5: memref<64x3xf32, #tpu.memory_space<vmem>>, %arg6: memref<2x8xf32, #tpu.memory_space<vmem>>) attributes {dimension_semantics = [#tpu.dimension_semantics<parallel>], iteration_bounds = array<i64: 1>, scalar_prefetch = 0 : i64, scratch_operands = 0 : i64, tpu.core_type = #tpu.core_type<tc>, window_params = [{transform_indices = @transform_0, window_bounds = array<i64: 20, 8>}, {pipeline_mode = #tpu.pipeline_mode<synchronous>, transform_indices = @transform_1, window_bounds = array<i64: 64, 20>}, {pipeline_mode = #tpu.pipeline_mode<synchronous>, transform_indices = @transform_2, window_bounds = array<i64: 64, 64>}, {pipeline_mode = #tpu.pipeline_mode<synchronous>, transform_indices = @transform_3, window_bounds = array<i64: 2, 64>}, {pipeline_mode = #tpu.pipeline_mode<synchronous>, transform_indices = @transform_4, window_bounds = array<i64: 64, 3>}, {transform_indices = @transform_5, window_bounds = array<i64: 2, 8>}]} {
    %c0 = arith.constant 0 : index
    %c0_0 = arith.constant 0 : index
    %0 = vector.load %arg2[%c0, %c0_0] : memref<64x20xbf16, #tpu.memory_space<vmem>>, vector<64x20xbf16>
    %c0_1 = arith.constant 0 : index
    %c0_2 = arith.constant 0 : index
    %1 = vector.load %arg1[%c0_1, %c0_2] : memref<20x8xbf16, #tpu.memory_space<vmem>>, vector<20x8xbf16>
    %cst = arith.constant dense<0.000000e+00> : vector<64x8xf32>
    %2 = tpu.matmul %0, %1, %cst {dimension_numbers = #tpu.dot_dimension_numbers<[1], [0], [0], [1], [0, 0, 1, 1], [], []>} : vector<64x20xbf16>, vector<20x8xbf16>, vector<64x8xf32> -> vector<64x8xf32>
    %c0_3 = arith.constant 0 : index
    %c0_4 = arith.constant 0 : index
    %3 = vector.load %arg5[%c0_3, %c0_4] : memref<64x3xf32, #tpu.memory_space<vmem>>, vector<64x1xf32>
    %4 = vector.broadcast %3 : vector<64x1xf32> to vector<64x8xf32>
    %5 = arith.addf %2, %4 : vector<64x8xf32>
    %cst_5 = arith.constant 0.000000e+00 : f32
    %6 = vector.broadcast %cst_5 : f32 to vector<64x8xf32>
    %7 = arith.maximumf %5, %6 : vector<64x8xf32>
    %c0_6 = arith.constant 0 : index
    %c0_7 = arith.constant 0 : index
    %8 = vector.load %arg3[%c0_6, %c0_7] : memref<64x64xbf16, #tpu.memory_space<vmem>>, vector<64x64xbf16>
    %9 = arith.truncf %7 : vector<64x8xf32> to vector<64x8xbf16>
    %cst_8 = arith.constant dense<0.000000e+00> : vector<64x8xf32>
    %10 = tpu.matmul %8, %9, %cst_8 {dimension_numbers = #tpu.dot_dimension_numbers<[1], [0], [0], [1], [0, 0, 1, 1], [], []>} : vector<64x64xbf16>, vector<64x8xbf16>, vector<64x8xf32> -> vector<64x8xf32>
    %c0_9 = arith.constant 0 : index
    %c1 = arith.constant 1 : index
    %11 = vector.load %arg5[%c0_9, %c1] : memref<64x3xf32, #tpu.memory_space<vmem>>, vector<64x1xf32>
    %12 = vector.broadcast %11 : vector<64x1xf32> to vector<64x8xf32>
    %13 = arith.addf %10, %12 : vector<64x8xf32>
    %cst_10 = arith.constant 0.000000e+00 : f32
    %14 = vector.broadcast %cst_10 : f32 to vector<64x8xf32>
    %15 = arith.maximumf %13, %14 : vector<64x8xf32>
    %c0_11 = arith.constant 0 : index
    %c0_12 = arith.constant 0 : index
    %16 = vector.load %arg4[%c0_11, %c0_12] : memref<2x64xbf16, #tpu.memory_space<vmem>>, vector<2x64xbf16>
    %17 = arith.truncf %15 : vector<64x8xf32> to vector<64x8xbf16>
    %cst_13 = arith.constant dense<0.000000e+00> : vector<2x8xf32>
    %18 = tpu.matmul %16, %17, %cst_13 {dimension_numbers = #tpu.dot_dimension_numbers<[1], [0], [0], [1], [0, 0, 1, 1], [], []>} : vector<2x64xbf16>, vector<64x8xbf16>, vector<2x8xf32> -> vector<2x8xf32>
    %c0_14 = arith.constant 0 : index
    %c2 = arith.constant 2 : index
    %19 = vector.load %arg5[%c0_14, %c2] : memref<64x3xf32, #tpu.memory_space<vmem>>, vector<2x1xf32>
    %20 = vector.broadcast %19 : vector<2x1xf32> to vector<2x8xf32>
    %21 = arith.addf %18, %20 : vector<2x8xf32>
    %c0_15 = arith.constant 0 : index
    %c0_16 = arith.constant 0 : index
    %22 = vector.load %arg6[%c0_15, %c0_16] : memref<2x8xf32, #tpu.memory_space<vmem>>, vector<2x8xf32>
    tpu.vector_store %arg6[%c0_15, %c0_16], %21 {strides = array<i32>} : memref<2x8xf32, #tpu.memory_space<vmem>>, vector<2x8xf32>,
    return
  }
  func.func @transform_0(%arg0: i32) -> (i32, i32) {
    %c0_i32 = arith.constant 0 : i32
    %c0_i32_0 = arith.constant 0 : i32
    return %c0_i32, %arg0 : i32, i32
  }
  func.func @transform_1(%arg0: i32) -> (i32, i32) {
    %c0_i32 = arith.constant 0 : i32
    %c0_i32_0 = arith.constant 0 : i32
    %c0_i32_1 = arith.constant 0 : i32
    return %c0_i32, %c0_i32_0 : i32, i32
  }
  func.func @transform_2(%arg0: i32) -> (i32, i32) {
    %c0_i32 = arith.constant 0 : i32
    %c0_i32_0 = arith.constant 0 : i32
    %c0_i32_1 = arith.constant 0 : i32
    return %c0_i32, %c0_i32_0 : i32, i32
  }
  func.func @transform_3(%arg0: i32) -> (i32, i32) {
    %c0_i32 = arith.constant 0 : i32
    %c0_i32_0 = arith.constant 0 : i32
    %c0_i32_1 = arith.constant 0 : i32
    return %c0_i32, %c0_i32_0 : i32, i32
  }
  func.func @transform_4(%arg0: i32) -> (i32, i32) {
    %c0_i32 = arith.constant 0 : i32
    %c0_i32_0 = arith.constant 0 : i32
    %c0_i32_1 = arith.constant 0 : i32
    return %c0_i32, %c0_i32_0 : i32, i32
  }
  func.func @transform_5(%arg0: i32) -> (i32, i32) {
    %c0_i32 = arith.constant 0 : i32
    %c0_i32_0 = arith.constant 0 : i32
    return %c0_i32, %arg0 : i32, i32
  }
}

</mosaic_0001>

<llo_original>
// kernel: qnetwork_forward.1
$region0: #{qnetwork_forward.1}
  #allocation0 [shape = 'u32[]', space=smem, size = 0x4, offset = 0x4, fixed_abs, tag = 'smem constant byte address 0x4 - core index']
  #allocation1 [shape = 'u32[144,128]{1,0:T(1,128)}', space=vmem, size = 0x12000, scoped, tag = 'internal scratch']
  %s0 = inlined_call_operand.vmem [shape: bf16[20,8], index: 0, kind: input, shape index: {}]
  %s1 = inlined_call_operand.vmem [shape: bf16[64,20], index: 1, kind: input, shape index: {}]
  %s2 = inlined_call_operand.vmem [shape: bf16[64,64], index: 2, kind: input, shape index: {}]
  %s3 = inlined_call_operand.vmem [shape: bf16[2,64], index: 3, kind: input, shape index: {}]
  %s4 = inlined_call_operand.vmem [shape: f32[64,3], index: 4, kind: input, shape index: {}]
  %s5 = inlined_call_operand.vmem [shape: f32[2,8], index: 5, kind: output, shape index: {}]
  %s6 = sld [smem:[#allocation0]]
  $region30: #{qnetwork_forward.1} parent=0
    _
  %s8 = ssub.s32 1, %s6
  %s9 = scalar_select 0, %s8, %s6
  // Predicated region
  $region2: #{qnetwork_forward.1} parent=0 // pred_check
    _
  $region3: #{qnetwork_forward.1} parent=0 // pred_check_branch
    %11 = sbr.rel (0) target = $region5
  $region4: #{qnetwork_forward.1} parent=0 // pred_region
    _
  $region5: #{qnetwork_forward.1} parent=0 // pred_fallthru
    _
  // Predicated region
  $region6: #{qnetwork_forward.1} parent=0 // pred_check
    _
  $region7: #{qnetwork_forward.1} parent=0 // pred_check_branch
    %13 = sbr.rel (0) target = $region9
  $region8: #{qnetwork_forward.1} parent=0 // pred_region
    _
  $region9: #{qnetwork_forward.1} parent=0 // pred_fallthru
    _
  // Predicated region
  $region10: #{qnetwork_forward.1} parent=0 // pred_check
    _
  $region11: #{qnetwork_forward.1} parent=0 // pred_check_branch
    %15 = sbr.rel (0) target = $region13
  $region12: #{qnetwork_forward.1} parent=0 // pred_region
    _
  $region13: #{qnetwork_forward.1} parent=0 // pred_fallthru
    _
  // Predicated region
  $region14: #{qnetwork_forward.1} parent=0 // pred_check
    _
  $region15: #{qnetwork_forward.1} parent=0 // pred_check_branch
    %17 = sbr.rel (0) target = $region17
  $region16: #{qnetwork_forward.1} parent=0 // pred_region
    _
  $region17: #{qnetwork_forward.1} parent=0 // pred_fallthru
    _
  // Predicated region
  $region18: #{qnetwork_forward.1} parent=0 // pred_check
    _
  $region19: #{qnetwork_forward.1} parent=0 // pred_check_branch
    %19 = sbr.rel (0) target = $region21
  $region20: #{qnetwork_forward.1} parent=0 // pred_region
    _
  $region21: #{qnetwork_forward.1} parent=0 // pred_fallthru
    _
  %v21 = vld [vmem:[%s1] sm:$0xf]
  %v22 = vld [vmem:[%s1 + $0x4] sm:$0xf]
  %v23 = vld [vmem:[%s1 + $0x8] sm:$0xf]
  %v24 = vld [vmem:[%s1 + $0xc] sm:$0xf]
  %v25 = vld [vmem:[%s1 + $0x10] sm:$0xf]
  %v26 = vld [vmem:[%s1 + $0x14] sm:$0xf]
  %v27 = vld [vmem:[%s1 + $0x18] sm:$0xf]
  %v28 = vld [vmem:[%s1 + $0x1c] sm:$0xf]
  %v29 = vld [vmem:[%s0] sm:$0xf]
  %v30 = vld [vmem:[%s0 + $0x4] sm:$0xf]
  %v31 = vld [vmem:[%s0 + $0x8] sm:$0x3]
  %v32 = vld [vmem:[%s4] sm:$0xff]
  %v33 = vld [vmem:[%s4 + $0x8] sm:$0xff]
  %v34 = vld [vmem:[%s4 + $0x10] sm:$0xff]
  %v35 = vld [vmem:[%s4 + $0x18] sm:$0xff]
  %v36 = vld [vmem:[%s4 + $0x20] sm:$0xff]
  %v37 = vld [vmem:[%s4 + $0x28] sm:$0xff]
  %v38 = vld [vmem:[%s4 + $0x30] sm:$0xff]
  %v39 = vld [vmem:[%s4 + $0x38] sm:$0xff]
  %41 = vset.pattern.permute.xlu0 0
  %42 = vperm.xlu0 %41, %v32
  %v43 = vpop.permute.xlu0 %42
  %46 = vset.pattern.permute.xlu0 0
  %47 = vperm.xlu0 %46, %v33
  %v48 = vpop.permute.xlu0 %47
  %51 = vset.pattern.permute.xlu0 0
  %52 = vperm.xlu0 %51, %v34
  %v53 = vpop.permute.xlu0 %52
  %56 = vset.pattern.permute.xlu0 0
  %57 = vperm.xlu0 %56, %v35
  %v58 = vpop.permute.xlu0 %57
  %61 = vset.pattern.permute.xlu0 0
  %62 = vperm.xlu0 %61, %v36
  %v63 = vpop.permute.xlu0 %62
  %66 = vset.pattern.permute.xlu0 0
  %67 = vperm.xlu0 %66, %v37
  %v68 = vpop.permute.xlu0 %67
  %71 = vset.pattern.permute.xlu0 0
  %72 = vperm.xlu0 %71, %v38
  %v73 = vpop.permute.xlu0 %72
  %76 = vset.pattern.permute.xlu0 0
  %77 = vperm.xlu0 %76, %v39
  %v78 = vpop.permute.xlu0 %77
  %v88 = vunpack.c.l.b16 %v21
  %v89 = vunpack.c.l.b16 %v22
  %v90 = vunpack.c.l.b16 %v23
  %v91 = vunpack.c.l.b16 %v24
  %v92 = vunpack.c.l.b16 %v25
  %v93 = vunpack.c.l.b16 %v26
  %v94 = vunpack.c.l.b16 %v27
  %v95 = vunpack.c.l.b16 %v28
  %v96 = vpack.c.b16 %v89, %v88
  %v97 = vpack.c.b16 %v91, %v90
  %v98 = vpack.c.b16 %v93, %v92
  %v99 = vpack.c.b16 %v95, %v94
  %v103 = vunpack.c.l.b16 %v29
  %v104 = vunpack.c.l.b16 %v30
  %v105 = vunpack.c.l.b16 %v31
  %v106 = vpack.c.b16 %v104, %v103
  %v107 = vpack.c.b16 %v105, %v105
  %vm109 = vcmask 162816
  %v111 = vsel %vm109, %v96, 0
  %v114 = vsel %vm109, %v97, 0
  %v117 = vsel %vm109, %v98, 0
  %v120 = vsel %vm109, %v99, 0
  %vm122 = vcmask 1041408
  %v124 = vsel %vm122, %v107, 0
  %126 = vmatprep.subr.bf16.mxu0 0
  %127 = vmatpush1.bf16.msra.mxu0 %v106
  %128 = vmatprep.subr.bf16.mxu0 0
  %129 = vmatpush1.bf16.msra.mxu0 %v124
  %130 = vmatprep.subr.bf16.mxu0 0
  %131 = vmatpush1.bf16.msra.mxu0 0
  %132 = vmatprep.subr.bf16.mxu0 0
  %133 = vmatpush1.bf16.msra.mxu0 0
  %134 = vmatprep.subr.bf16.mxu0 0
  %135 = vmatpush1.bf16.msra.mxu0 0
  %136 = vmatprep.subr.bf16.mxu0 0
  %137 = vmatpush1.bf16.msra.mxu0 0
  %138 = vmatprep.subr.bf16.mxu0 0
  %139 = vmatpush1.bf16.msra.mxu0 0
  %140 = vmatprep.subr.bf16.mxu0 0
  %141 = vmatpush1.bf16.msra.mxu0 0
  %142 = vmatprep.subr.bf16.mxu0 0
  %143 = vmatpush1.bf16.msra.mxu0 0
  %144 = vmatprep.subr.bf16.mxu0 0
  %145 = vmatpush1.bf16.msra.mxu0 0
  %146 = vmatprep.subr.bf16.mxu0 0
  %147 = vmatpush1.bf16.msra.mxu0 0
  %148 = vmatprep.subr.bf16.mxu0 0
  %149 = vmatpush1.bf16.msra.mxu0 0
  %150 = vmatprep.subr.bf16.mxu0 0
  %151 = vmatpush1.bf16.msra.mxu0 0
  %152 = vmatprep.subr.bf16.mxu0 0
  %153 = vmatpush1.bf16.msra.mxu0 0
  %154 = vmatprep.subr.bf16.mxu0 0
  %155 = vmatpush1.bf16.msra.mxu0 0
  %156 = vmatprep.subr.bf16.mxu0 0
  %157 = vmatpush1.bf16.msra.mxu0 0
  %158 = vmatprep.mubr.bf16.mxu0 0
  %159 = vmatmul.mubr.bf16.gmra.mrb[0].mxu0 %v111
  %v160 = vpop.f32.mrb[0].mxu0
  %v161 = vadd.f32 %v43, %v160
  %v162 = vpop.f32.mrb[0].mxu0
  %v163 = vpop.f32.mrb[0].mxu0
  %v164 = vadd.f32 %v48, %v163
  %v165 = vpop.f32.mrb[0].mxu0
  %166 = vmatprep.mubr.bf16.mxu0 0
  %167 = vmatmul.mubr.bf16.gmra.mrb[0].mxu0 %v114
  %v168 = vpop.f32.mrb[0].mxu0
  %v169 = vadd.f32 %v53, %v168
  %v170 = vpop.f32.mrb[0].mxu0
  %v171 = vpop.f32.mrb[0].mxu0
  %v172 = vadd.f32 %v58, %v171
  %v173 = vpop.f32.mrb[0].mxu0
  %174 = vmatprep.mubr.bf16.mxu0 0
  %175 = vmatmul.mubr.bf16.gmra.mrb[0].mxu0 %v117
  %v176 = vpop.f32.mrb[0].mxu0
  %v177 = vadd.f32 %v63, %v176
  %v178 = vpop.f32.mrb[0].mxu0
  %v179 = vpop.f32.mrb[0].mxu0
  %v180 = vadd.f32 %v68, %v179
  %v181 = vpop.f32.mrb[0].mxu0
  %182 = vmatprep.mubr.bf16.mxu0 0
  %183 = vmatmul.mubr.bf16.gmra.mrb[0].mxu0 %v120
  %v184 = vpop.f32.mrb[0].mxu0
  %v185 = vadd.f32 %v73, %v184
  %v186 = vpop.f32.mrb[0].mxu0
  %v187 = vpop.f32.mrb[0].mxu0
  %v188 = vadd.f32 %v78, %v187
  %v189 = vpop.f32.mrb[0].mxu0
  %190 = vdwg.mxu0
  %v191 = vmax.f32 %v161, 0.0
  %v192 = vmax.f32 %v164, 0.0
  %v193 = vmax.f32 %v169, 0.0
  %v194 = vmax.f32 %v172, 0.0
  %v195 = vmax.f32 %v177, 0.0
  %v196 = vmax.f32 %v180, 0.0
  %v197 = vmax.f32 %v185, 0.0
  %v198 = vmax.f32 %v188, 0.0
  %v199 = vld [vmem:[%s2] sm:$0xf]
  %v200 = vld [vmem:[%s2 + $0x4] sm:$0xf]
  %v201 = vld [vmem:[%s2 + $0x8] sm:$0xf]
  %v202 = vld [vmem:[%s2 + $0xc] sm:$0xf]
  %v203 = vld [vmem:[%s2 + $0x10] sm:$0xf]
  %v204 = vld [vmem:[%s2 + $0x14] sm:$0xf]
  %v205 = vld [vmem:[%s2 + $0x18] sm:$0xf]
  %v206 = vld [vmem:[%s2 + $0x1c] sm:$0xf]
  %v207 = vpack.c.bf16 %v192, %v191
  %v208 = vpack.c.bf16 %v194, %v193
  %v209 = vpack.c.bf16 %v196, %v195
  %v210 = vpack.c.bf16 %v198, %v197
  %211 = vset.pattern.permute.xlu0 1
  %212 = vperm.xlu0 %211, %v32
  %v213 = vpop.permute.xlu0 %212
  %215 = vset.pattern.permute.xlu0 1
  %216 = vperm.xlu0 %215, %v33
  %v217 = vpop.permute.xlu0 %216
  %219 = vset.pattern.permute.xlu0 1
  %220 = vperm.xlu0 %219, %v34
  %v221 = vpop.permute.xlu0 %220
  %223 = vset.pattern.permute.xlu0 1
  %224 = vperm.xlu0 %223, %v35
  %v225 = vpop.permute.xlu0 %224
  %227 = vset.pattern.permute.xlu0 1
  %228 = vperm.xlu0 %227, %v36
  %v229 = vpop.permute.xlu0 %228
  %231 = vset.pattern.permute.xlu0 1
  %232 = vperm.xlu0 %231, %v37
  %v233 = vpop.permute.xlu0 %232
  %235 = vset.pattern.permute.xlu0 1
  %236 = vperm.xlu0 %235, %v38
  %v237 = vpop.permute.xlu0 %236
  %239 = vset.pattern.permute.xlu0 1
  %240 = vperm.xlu0 %239, %v39
  %v241 = vpop.permute.xlu0 %240
  %v251 = vunpack.c.l.b16 %v199
  %v252 = vunpack.c.l.b16 %v200
  %v253 = vunpack.c.l.b16 %v201
  %v254 = vunpack.c.l.b16 %v202
  %v255 = vunpack.c.l.b16 %v203
  %v256 = vunpack.c.l.b16 %v204
  %v257 = vunpack.c.l.b16 %v205
  %v258 = vunpack.c.l.b16 %v206
  %v259 = vpack.c.b16 %v252, %v251
  %v260 = vpack.c.b16 %v254, %v253
  %v261 = vpack.c.b16 %v256, %v255
  %v262 = vpack.c.b16 %v258, %v257
  %vm263 = vcmask 523264
  %v265 = vsel %vm263, %v259, 0
  %v268 = vsel %vm263, %v260, 0
  %v271 = vsel %vm263, %v261, 0
  %v274 = vsel %vm263, %v262, 0
  %276 = vmatprep.subr.bf16.mxu0 0
  %277 = vmatpush1.bf16.msra.mxu0 %v207
  %278 = vmatprep.subr.bf16.mxu0 0
  %279 = vmatpush1.bf16.msra.mxu0 %v208
  %280 = vmatprep.subr.bf16.mxu0 0
  %281 = vmatpush1.bf16.msra.mxu0 %v209
  %282 = vmatprep.subr.bf16.mxu0 0
  %283 = vmatpush1.bf16.msra.mxu0 %v210
  %284 = vmatprep.subr.bf16.mxu0 0
  %285 = vmatpush1.bf16.msra.mxu0 0
  %286 = vmatprep.subr.bf16.mxu0 0
  %287 = vmatpush1.bf16.msra.mxu0 0
  %288 = vmatprep.subr.bf16.mxu0 0
  %289 = vmatpush1.bf16.msra.mxu0 0
  %290 = vmatprep.subr.bf16.mxu0 0
  %291 = vmatpush1.bf16.msra.mxu0 0
  %292 = vmatprep.subr.bf16.mxu0 0
  %293 = vmatpush1.bf16.msra.mxu0 0
  %294 = vmatprep.subr.bf16.mxu0 0
  %295 = vmatpush1.bf16.msra.mxu0 0
  %296 = vmatprep.subr.bf16.mxu0 0
  %297 = vmatpush1.bf16.msra.mxu0 0
  %298 = vmatprep.subr.bf16.mxu0 0
  %299 = vmatpush1.bf16.msra.mxu0 0
  %300 = vmatprep.subr.bf16.mxu0 0
  %301 = vmatpush1.bf16.msra.mxu0 0
  %302 = vmatprep.subr.bf16.mxu0 0
  %303 = vmatpush1.bf16.msra.mxu0 0
  %304 = vmatprep.subr.bf16.mxu0 0
  %305 = vmatpush1.bf16.msra.mxu0 0
  %306 = vmatprep.subr.bf16.mxu0 0
  %307 = vmatpush1.bf16.msra.mxu0 0
  %308 = vmatprep.mubr.bf16.mxu0 0
  %309 = vmatmul.mubr.bf16.gmra.mrb[0].mxu0 %v265
  %v310 = vpop.f32.mrb[0].mxu0
  %v311 = vadd.f32 %v213, %v310
  %v312 = vpop.f32.mrb[0].mxu0
  %v313 = vpop.f32.mrb[0].mxu0
  %v314 = vadd.f32 %v217, %v313
  %v315 = vpop.f32.mrb[0].mxu0
  %316 = vmatprep.mubr.bf16.mxu0 0
  %317 = vmatmul.mubr.bf16.gmra.mrb[0].mxu0 %v268
  %v318 = vpop.f32.mrb[0].mxu0
  %v319 = vadd.f32 %v221, %v318
  %v320 = vpop.f32.mrb[0].mxu0
  %v321 = vpop.f32.mrb[0].mxu0
  %v322 = vadd.f32 %v225, %v321
  %v323 = vpop.f32.mrb[0].mxu0
  %324 = vmatprep.mubr.bf16.mxu0 0
  %325 = vmatmul.mubr.bf16.gmra.mrb[0].mxu0 %v271
  %v326 = vpop.f32.mrb[0].mxu0
  %v327 = vadd.f32 %v229, %v326
  %v328 = vpop.f32.mrb[0].mxu0
  %v329 = vpop.f32.mrb[0].mxu0
  %v330 = vadd.f32 %v233, %v329
  %v331 = vpop.f32.mrb[0].mxu0
  %332 = vmatprep.mubr.bf16.mxu0 0
  %333 = vmatmul.mubr.bf16.gmra.mrb[0].mxu0 %v274
  %v334 = vpop.f32.mrb[0].mxu0
  %v335 = vadd.f32 %v237, %v334
  %v336 = vpop.f32.mrb[0].mxu0
  %v337 = vpop.f32.mrb[0].mxu0
  %v338 = vadd.f32 %v241, %v337
  %v339 = vpop.f32.mrb[0].mxu0
  %340 = vdwg.mxu0
  %v341 = vmax.f32 %v311, 0.0
  %v342 = vmax.f32 %v314, 0.0
  %v343 = vmax.f32 %v319, 0.0
  %v344 = vmax.f32 %v322, 0.0
  %v345 = vmax.f32 %v327, 0.0
  %v346 = vmax.f32 %v330, 0.0
  %v347 = vmax.f32 %v335, 0.0
  %v348 = vmax.f32 %v338, 0.0
  %v349 = vld [vmem:[%s3] sm:$0x1]
  %v350 = vpack.c.bf16 %v342, %v341
  %v351 = vpack.c.bf16 %v344, %v343
  %v352 = vpack.c.bf16 %v346, %v345
  %v353 = vpack.c.bf16 %v348, %v347
  %v354 = vld [vmem:[%s4] sm:$0x3]
  %356 = vset.pattern.permute.xlu0 2
  %357 = vperm.xlu0 %356, %v354
  %v358 = vpop.permute.xlu0 %357
  %v361 = vsel %vm263, %v349, 0
  %363 = vmatprep.subr.bf16.mxu0 0
  %364 = vmatpush1.bf16.msra.mxu0 %v350
  %365 = vmatprep.subr.bf16.mxu0 0
  %366 = vmatpush1.bf16.msra.mxu0 %v351
  %367 = vmatprep.subr.bf16.mxu0 0
  %368 = vmatpush1.bf16.msra.mxu0 %v352
  %369 = vmatprep.subr.bf16.mxu0 0
  %370 = vmatpush1.bf16.msra.mxu0 %v353
  %371 = vmatprep.subr.bf16.mxu0 0
  %372 = vmatpush1.bf16.msra.mxu0 0
  %373 = vmatprep.subr.bf16.mxu0 0
  %374 = vmatpush1.bf16.msra.mxu0 0
  %375 = vmatprep.subr.bf16.mxu0 0
  %376 = vmatpush1.bf16.msra.mxu0 0
  %377 = vmatprep.subr.bf16.mxu0 0
  %378 = vmatpush1.bf16.msra.mxu0 0
  %379 = vmatprep.subr.bf16.mxu0 0
  %380 = vmatpush1.bf16.msra.mxu0 0
  %381 = vmatprep.subr.bf16.mxu0 0
  %382 = vmatpush1.bf16.msra.mxu0 0
  %383 = vmatprep.subr.bf16.mxu0 0
  %384 = vmatpush1.bf16.msra.mxu0 0
  %385 = vmatprep.subr.bf16.mxu0 0
  %386 = vmatpush1.bf16.msra.mxu0 0
  %387 = vmatprep.subr.bf16.mxu0 0
  %388 = vmatpush1.bf16.msra.mxu0 0
  %389 = vmatprep.subr.bf16.mxu0 0
  %390 = vmatpush1.bf16.msra.mxu0 0
  %391 = vmatprep.subr.bf16.mxu0 0
  %392 = vmatpush1.bf16.msra.mxu0 0
  %393 = vmatprep.subr.bf16.mxu0 0
  %394 = vmatpush1.bf16.msra.mxu0 0
  %395 = vmatprep.mubr.bf16.mxu0 0
  %396 = vmatmul.mubr.bf16.gmra.mrb[0].mxu0 %v361
  %v397 = vpop.f32.mrb[0].mxu0
  %v398 = vadd.f32 %v358, %v397
  %v399 = vpop.f32.mrb[0].mxu0
  %v400 = vpop.f32.mrb[0].mxu0
  %v401 = vpop.f32.mrb[0].mxu0
  %402 = vdwg.mxu0
  %vm403 = vcmask 58368
  %404 = vst.msk [vmem:[%s5] sm:$0x3] %vm403, %v398
  // Predicated region
  $region22: #{qnetwork_forward.1} parent=0 // pred_check
    _
  $region23: #{qnetwork_forward.1} parent=0 // pred_check_branch
    %406 = sbr.rel (0) target = $region25
  $region24: #{qnetwork_forward.1} parent=0 // pred_region
    _
  $region25: #{qnetwork_forward.1} parent=0 // pred_fallthru
    _
  // Predicated region
  $region26: #{qnetwork_forward.1} parent=0 // pred_check
    _
  $region27: #{qnetwork_forward.1} parent=0 // pred_check_branch
    %408 = sbr.rel (0) target = $region29
  $region28: #{qnetwork_forward.1} parent=0 // pred_region
    _
  $region29: #{qnetwork_forward.1} parent=0 // pred_fallthru
    _

</llo_original>
